<compile_context>
chip_gen: v5e
topology: v5e:2x2
jax: 0.10.0
libtpu: 0.0.40
codegen_flags: <defaults>
</compile_context>

<pallas_src>
import functools

import jax
import jax.numpy as jnp
from jax import lax
from jax.experimental import pallas as pl
from jax.experimental.pallas import tpu as pltpu


def _context_attention_kernel(x_ref, mask_ref, wt_ref, b_ref, ctx_ref,
                              scores_ref, emb_ref, *, mask_value):
    """One grid step processes TB batch elements.

    x_ref      : (TB, S, D)        f32 (cast to the MXU dtype in-kernel)
    mask_ref   : (TB, 1, S)        f32, 1 = keep, 0 = masked (lane-dense in S)
    wt_ref     : (NC, D, NCHUNK)   compute dtype, W_e.T split over output columns
    b_ref      : (NC, 1, NCHUNK)   f32 bias chunks
    ctx_ref    : (NC, 1, NCHUNK)   f32 context-vector chunks (row layout)
    scores_ref : (TB, 1, S)        f32, lane-dense attention scores
    emb_ref    : (TB, 1, D)        f32 sentence embedding
    """
    TB, S, D = x_ref.shape
    n_chunks = wt_ref.shape[0]
    neg = jnp.float32(mask_value)

    # MXU LHS: all TB*S tokens fused into one big-M operand (cast once, up front).
    x2 = x_ref[...].reshape(TB * S, D).astype(wt_ref.dtype)

    # Chunked projection: tanh + context reduction of chunk k co-issue with the
    # MXU matmul of chunk k+1; dot-with-context is a VPU mul + lane reduction.
    def chunk_body(k, dotc):
        e_k = jnp.tanh(
            jnp.dot(x2, wt_ref[k], preferred_element_type=jnp.float32) + b_ref[k]
        )                                                        # (TB*S, NCHUNK) f32
        return dotc + jnp.sum(e_k * ctx_ref[k], axis=-1, keepdims=True)

    dotc = lax.fori_loop(0, n_chunks, chunk_body,
                         jnp.zeros((TB * S, 1), jnp.float32), unroll=True)

    # Batched, lane-dense masked softmax over the sequence (one small relayout,
    # no per-batch-element unrolled loop).
    logits = jnp.swapaxes(dotc.reshape(TB, S, 1), 1, 2)          # (TB, 1, S)
    masked = jnp.where(mask_ref[...] == 0.0, neg, logits)
    m = jnp.max(masked, axis=-1, keepdims=True)
    p = jnp.exp(masked - m)
    a = p * (1.0 / jnp.sum(p, axis=-1, keepdims=True))           # exact reciprocal
    scores_ref[...] = a                                          # lane-dense store

    # Sentence embedding as a VPU weighted sum over f32 x (no M=1 MXU matmuls).
    a_col = jnp.swapaxes(a, 1, 2)                                # (TB, S, 1)
    emb_ref[...] = jnp.sum(a_col * x_ref[...], axis=1, keepdims=True)


def _round_up(n, m):
    return ((n + m - 1) // m) * m


def _is_v7x():
    try:
        kind = jax.devices()[0].device_kind.lower()
    except Exception:
        return False
    return "v7" in kind


def _choose_batch_tile(B, S, D, cd_itemsize, x_budget_bytes):
    """Batch elements fused per grid step.

    Targets ~2048 rows in the fused (TB*S, D) matmul (amortizes the ~0.35us/step
    grid overhead and fills the MXU M dim), bounded by a per-generation VMEM
    budget for the double-buffered f32 x tile + in-kernel temporaries, and kept
    <= B//2 so the 1-D grid always has >= 2 steps (v7x megacore + DMA overlap).
    """
    target_rows = 2048
    tb_rows = max(1, -(-target_rows // S))
    # per-batch-element VMEM: 2x f32 x tile + f32 load/product temps + bf16 copy.
    per_b = S * (D * (2 * 4 + 8 + cd_itemsize) + 256 * 8)
    tb_vmem = max(1, x_budget_bytes // max(1, per_b))
    tb = min(tb_rows, tb_vmem, 64)
    if B >= 2:
        tb = min(tb, max(1, B // 2))
    return max(1, min(tb, B))


def _vmem_limit_bytes(TB, S, D, nchunk, cd_itemsize, v7x):
    x_tile = TB * S * D * 4
    temps = TB * S * (D * (8 + cd_itemsize) + 2 * nchunk * 4 + 64)
    weights = D * D * cd_itemsize + 4 * D * 4
    io_small = TB * (2 * S + D) * 4
    est = 2 * x_tile + temps + 2 * weights + 2 * io_small + (4 << 20)
    cap = (48 << 20) if v7x else (100 << 20)
    return int(min(max(est, 32 << 20), cap))


@functools.partial(
    jax.jit, static_argnames=("mask_value", "mask_special_tokens", "compute_dtype"))
def context_attention_forward(token_embeddings, attention_mask, w_e, b_e, context,
                              embeddings=None, mask_value=-100.0,
                              mask_special_tokens=False,
                              compute_dtype=jnp.bfloat16):
    """token_embeddings: [B,S,D]; attention_mask: [B,S] (0/1); w_e: [D,D] (torch
    Linear weight); b_e: [D]; context: [D].  Returns scores [B,S] and
    sentence_embedding [B,D]."""
    x = jnp.asarray(token_embeddings, jnp.float32)
    if embeddings is not None:
        x = x + jnp.asarray(embeddings, jnp.float32)
    mask = jnp.asarray(attention_mask, jnp.float32)

    if mask_special_tokens:
        # Same mask surgery as the torch code (CLS + final SEP masked out).
        B0 = mask.shape[0]
        sep_cols = (jnp.sum(mask, axis=1) - 1).astype(jnp.int32)
        rows = jnp.arange(B0, dtype=jnp.int32)
        mask = mask.at[rows, sep_cols].set(0.0)
        mask = mask.at[:, 0].set(0.0)

    B, S, D = x.shape
    cd = jnp.dtype(compute_dtype)

    # ---- layout plumbing: pad to aligned shapes (fuses with the add under jit),
    #      trim after the kernel; x stays f32 end-to-end. ----
    S_pad = _round_up(S, 8)
    D_pad = _round_up(D, 128)
    nchunk = 256 if D_pad % 256 == 0 else 128
    n_chunks = D_pad // nchunk

    v7x = _is_v7x()
    x_budget = (20 << 20) if v7x else (40 << 20)
    TB = _choose_batch_tile(B, S_pad, D_pad, cd.itemsize, x_budget)
    B_pad = _round_up(B, TB)

    if (B_pad, S_pad, D_pad) != (B, S, D):
        x = jnp.pad(x, ((0, B_pad - B), (0, S_pad - S), (0, D_pad - D)))
    if (B_pad, S_pad) != (B, S):
        mask = jnp.pad(mask, ((0, B_pad - B), (0, S_pad - S)))   # pads are masked out
    mask3 = mask.reshape(B_pad, 1, S_pad)                        # lane-dense mask

    # Grid-invariant parameters: W_e.T pre-split into output-column chunks; bias
    # and context as (n_chunks, 1, nchunk) rows (context never touches the MXU).
    wt = jnp.asarray(w_e, jnp.float32).T                         # kernel does x @ W.T
    b1 = jnp.asarray(b_e, jnp.float32)
    u1 = jnp.asarray(context, jnp.float32)
    if D_pad != D:
        wt = jnp.pad(wt, ((0, D_pad - D), (0, D_pad - D)))
        b1 = jnp.pad(b1, (0, D_pad - D))
        u1 = jnp.pad(u1, (0, D_pad - D))
    wt_c = wt.reshape(D_pad, n_chunks, nchunk).transpose(1, 0, 2).astype(cd)
    b_c = b1.reshape(n_chunks, 1, nchunk)
    u_c = u1.reshape(n_chunks, 1, nchunk)

    kernel = functools.partial(_context_attention_kernel,
                               mask_value=float(mask_value))

    scores3, emb3 = pl.pallas_call(
        kernel,
        out_shape=(
            jax.ShapeDtypeStruct((B_pad, 1, S_pad), jnp.float32),   # attention scores
            jax.ShapeDtypeStruct((B_pad, 1, D_pad), jnp.float32),   # sentence embedding
        ),
        grid_spec=pltpu.PrefetchScalarGridSpec(
            num_scalar_prefetch=0,
            grid=(B_pad // TB,),
            in_specs=[
                pl.BlockSpec((TB, S_pad, D_pad), lambda b: (b, 0, 0)),       # x (f32)
                pl.BlockSpec((TB, 1, S_pad), lambda b: (b, 0, 0)),           # mask
                # grid-invariant operands (constant index_map -> DMA'd once)
                pl.BlockSpec((n_chunks, D_pad, nchunk), lambda b: (0, 0, 0)),  # W_e.T chunks
                pl.BlockSpec((n_chunks, 1, nchunk), lambda b: (0, 0, 0)),      # bias chunks
                pl.BlockSpec((n_chunks, 1, nchunk), lambda b: (0, 0, 0)),      # context chunks
            ],
            out_specs=[
                pl.BlockSpec((TB, 1, S_pad), lambda b: (b, 0, 0)),
                pl.BlockSpec((TB, 1, D_pad), lambda b: (b, 0, 0)),
            ],
        ),
        compiler_params=pltpu.CompilerParams(
            dimension_semantics=("parallel",),   # batch-tile axis shards across TCs
            vmem_limit_bytes=_vmem_limit_bytes(TB, S_pad, D_pad, nchunk,
                                               cd.itemsize, v7x),
        ),
    )(x, mask3, wt_c, b_c, u_c)

    return {
        "scores": scores3[:B, 0, :S],
        "sentence_embedding": emb3[:B, 0, :D],
    }


def _reference(x, mask, w_e, b_e, context, mask_value=-100.0):
    # Pure-JAX reference of the torch forward (mask_special_tokens=False path).
    e = jnp.tanh(jnp.einsum("bsd,ed->bse", x, w_e) + b_e)
    dot = jnp.einsum("bsd,d->bs", e, context)[..., None]
    masked = jnp.where(mask[..., None] == 0, mask_value, dot)
    a = jax.nn.softmax(masked, axis=1)
    return a.squeeze(-1), jnp.sum(a * x, axis=1)


if __name__ == "__main__":
    B, S, D = 2, 8, 32
    key = jax.random.PRNGKey(0)
    k_x, k_w, k_b, k_c = jax.random.split(key, 4)

    token_embeddings = jax.random.normal(k_x, (B, S, D), dtype=jnp.float32)
    # mask: last two tokens of batch element 1 are padding
    attention_mask = jnp.ones((B, S), dtype=jnp.float32)
    attention_mask = attention_mask.at[1, S - 2:].set(0.0)

    # deterministic synthetic parameters (Linear weight [D, D], bias [D], context [D])
    w_e = jax.random.normal(k_w, (D, D), dtype=jnp.float32) * 0.05
    b_e = jax.random.normal(k_b, (D,), dtype=jnp.float32) * 0.05
    context = jax.random.normal(k_c, (D,), dtype=jnp.float32) * 0.02

    ref_scores, ref_emb = _reference(token_embeddings, attention_mask, w_e, b_e, context)

    # f32 path: tight check against the reference.
    out32 = context_attention_forward(token_embeddings, attention_mask, w_e, b_e,
                                      context, compute_dtype=jnp.float32)
    jax.block_until_ready(out32)
    assert out32["scores"].shape == (B, S)
    assert out32["sentence_embedding"].shape == (B, D)
    assert jnp.allclose(out32["scores"], ref_scores, atol=2e-3, rtol=2e-3)
    assert jnp.allclose(out32["sentence_embedding"], ref_emb, atol=2e-3, rtol=2e-3)

    # default bf16-MXU-input path: looser tolerance (f32 accumulation + f32 x in
    # the weighted sum; only `e` sees bf16 inputs).
    out16 = context_attention_forward(token_embeddings, attention_mask, w_e, b_e, context)
    jax.block_until_ready(out16)
    assert out16["scores"].shape == (B, S)
    assert out16["sentence_embedding"].shape == (B, D)
    assert jnp.allclose(out16["scores"], ref_scores, atol=3e-2, rtol=3e-2)
    assert jnp.allclose(out16["sentence_embedding"], ref_emb, atol=3e-2, rtol=3e-2)

    print("KERNEL_OK")
</pallas_src>

<mosaic_0001>
module attributes {stable_mosaic.version = 11 : i64} {
  func.func @_context_attention_kernel(%arg0: i32, %arg1: memref<1x8x128xf32, #tpu.memory_space<vmem>>, %arg2: memref<1x1x8xf32, #tpu.memory_space<vmem>>, %arg3: memref<1x128x128xf32, #tpu.memory_space<vmem>>, %arg4: memref<1x1x128xf32, #tpu.memory_space<vmem>>, %arg5: memref<1x1x128xf32, #tpu.memory_space<vmem>>, %arg6: memref<1x1x8xf32, #tpu.memory_space<vmem>>, %arg7: memref<1x1x128xf32, #tpu.memory_space<vmem>>) attributes {dimension_semantics = [#tpu.dimension_semantics<parallel>], iteration_bounds = array<i64: 2>, scalar_prefetch = 0 : i64, scratch_operands = 0 : i64, tpu.core_type = #tpu.core_type<tc>, window_params = [{transform_indices = @transform_0, window_bounds = array<i64: 1, 8, 128>}, {transform_indices = @transform_1, window_bounds = array<i64: 1, 1, 8>}, {pipeline_mode = #tpu.pipeline_mode<synchronous>, transform_indices = @transform_2, window_bounds = array<i64: 1, 128, 128>}, {pipeline_mode = #tpu.pipeline_mode<synchronous>, transform_indices = @transform_3, window_bounds = array<i64: 1, 1, 128>}, {pipeline_mode = #tpu.pipeline_mode<synchronous>, transform_indices = @transform_4, window_bounds = array<i64: 1, 1, 128>}, {transform_indices = @transform_5, window_bounds = array<i64: 1, 1, 8>}, {transform_indices = @transform_6, window_bounds = array<i64: 1, 1, 128>}]} {
    %c0 = arith.constant 0 : index
    %c0_0 = arith.constant 0 : index
    %c0_1 = arith.constant 0 : index
    %0 = vector.load %arg1[%c0, %c0_0, %c0_1] : memref<1x8x128xf32, #tpu.memory_space<vmem>>, vector<1x8x128xf32>
    %1 = vector.shape_cast %0 : vector<1x8x128xf32> to vector<8x128xf32>
    %cst = arith.constant 0.000000e+00 : f32
    %2 = vector.broadcast %cst : f32 to vector<8x1xf32>
    %c0_i32 = arith.constant 0 : i32
    %3 = arith.index_cast %c0_i32 : i32 to index
    %c0_2 = arith.constant 0 : index
    %c0_3 = arith.constant 0 : index
    %4 = vector.load %arg3[%3, %c0_2, %c0_3] : memref<1x128x128xf32, #tpu.memory_space<vmem>>, vector<1x128x128xf32>
    %5 = vector.shape_cast %4 : vector<1x128x128xf32> to vector<128x128xf32>
    %cst_4 = arith.constant dense<0.000000e+00> : vector<8x128xf32>
    %6 = tpu.matmul %1, %5, %cst_4 {dimension_numbers = #tpu.dot_dimension_numbers<[1], [0], [0], [1], [0, 0, 1, 1], [], []>} : vector<8x128xf32>, vector<128x128xf32>, vector<8x128xf32> -> vector<8x128xf32>
    %7 = arith.index_cast %c0_i32 : i32 to index
    %c0_5 = arith.constant 0 : index
    %c0_6 = arith.constant 0 : index
    %8 = vector.load %arg4[%7, %c0_5, %c0_6] : memref<1x1x128xf32, #tpu.memory_space<vmem>>, vector<1x1x128xf32>
    %9 = vector.shape_cast %8 : vector<1x1x128xf32> to vector<1x128xf32>
    %10 = vector.broadcast %9 : vector<1x128xf32> to vector<8x128xf32>
    %11 = arith.addf %6, %10 : vector<8x128xf32>
    %12 = math.tanh %11 : vector<8x128xf32>
    %13 = arith.index_cast %c0_i32 : i32 to index
    %c0_7 = arith.constant 0 : index
    %c0_8 = arith.constant 0 : index
    %14 = vector.load %arg5[%13, %c0_7, %c0_8] : memref<1x1x128xf32, #tpu.memory_space<vmem>>, vector<1x1x128xf32>
    %15 = vector.shape_cast %14 : vector<1x1x128xf32> to vector<1x128xf32>
    %16 = vector.broadcast %15 : vector<1x128xf32> to vector<8x128xf32>
    %17 = arith.mulf %12, %16 : vector<8x128xf32>
    %cst_9 = arith.constant dense<0.000000e+00> : vector<8xf32>
    %18 = vector.multi_reduction <add>, %17, %cst_9 [1] : vector<8x128xf32> to vector<8xf32>
    %19 = vector.shape_cast %18 : vector<8xf32> to vector<8x1xf32>
    %20 = arith.addf %2, %19 : vector<8x1xf32>
    %c1_i32 = arith.constant 1 : i32
    %21 = vector.shape_cast %20 : vector<8x1xf32> to vector<1x8x1xf32>
    %22 = tpu.transpose %21, [0, 2, 1] : vector<1x8x1xf32> -> vector<1x1x8xf32>
    %c0_10 = arith.constant 0 : index
    %c0_11 = arith.constant 0 : index
    %c0_12 = arith.constant 0 : index
    %23 = vector.load %arg2[%c0_10, %c0_11, %c0_12] : memref<1x1x8xf32, #tpu.memory_space<vmem>>, vector<1x1x8xf32>
    %cst_13 = arith.constant 0.000000e+00 : f32
    %24 = vector.broadcast %cst_13 : f32 to vector<1x1x8xf32>
    %25 = arith.cmpf oeq, %23, %24 : vector<1x1x8xf32>
    %cst_14 = arith.constant -1.000000e+02 : f32
    %26 = vector.broadcast %cst_14 : f32 to vector<1x1x8xf32>
    %27 = arith.select %25, %26, %22 : vector<1x1x8xi1>, vector<1x1x8xf32>
    %cst_15 = arith.constant dense<0xFF800000> : vector<1x1xf32>
    %28 = vector.multi_reduction <maximumf>, %27, %cst_15 [2] : vector<1x1x8xf32> to vector<1x1xf32>
    %29 = vector.shape_cast %28 : vector<1x1xf32> to vector<1x1x1xf32>
    %30 = vector.broadcast %29 : vector<1x1x1xf32> to vector<1x1x8xf32>
    %31 = arith.subf %27, %30 : vector<1x1x8xf32>
    %32 = math.exp %31 : vector<1x1x8xf32>
    %cst_16 = arith.constant dense<0.000000e+00> : vector<1x1xf32>
    %33 = vector.multi_reduction <add>, %32, %cst_16 [2] : vector<1x1x8xf32> to vector<1x1xf32>
    %34 = vector.shape_cast %33 : vector<1x1xf32> to vector<1x1x1xf32>
    %cst_17 = arith.constant 1.000000e+00 : f32
    %35 = vector.broadcast %cst_17 : f32 to vector<1x1x1xf32>
    %36 = arith.divf %35, %34 : vector<1x1x1xf32>
    %37 = vector.broadcast %36 : vector<1x1x1xf32> to vector<1x1x8xf32>
    %38 = arith.mulf %32, %37 : vector<1x1x8xf32>
    %c0_18 = arith.constant 0 : index
    %c0_19 = arith.constant 0 : index
    %c0_20 = arith.constant 0 : index
    %39 = vector.load %arg6[%c0_18, %c0_19, %c0_20] : memref<1x1x8xf32, #tpu.memory_space<vmem>>, vector<1x1x8xf32>
    tpu.vector_store %arg6[%c0_18, %c0_19, %c0_20], %38 {strides = array<i32>} : memref<1x1x8xf32, #tpu.memory_space<vmem>>, vector<1x1x8xf32>,
    %40 = tpu.transpose %38, [0, 2, 1] : vector<1x1x8xf32> -> vector<1x8x1xf32>
    %c0_21 = arith.constant 0 : index
    %c0_22 = arith.constant 0 : index
    %c0_23 = arith.constant 0 : index
    %41 = vector.load %arg1[%c0_21, %c0_22, %c0_23] : memref<1x8x128xf32, #tpu.memory_space<vmem>>, vector<1x8x128xf32>
    %42 = vector.broadcast %40 : vector<1x8x1xf32> to vector<1x8x128xf32>
    %43 = arith.mulf %42, %41 : vector<1x8x128xf32>
    %cst_24 = arith.constant dense<0.000000e+00> : vector<1x128xf32>
    %44 = vector.multi_reduction <add>, %43, %cst_24 [1] : vector<1x8x128xf32> to vector<1x128xf32>
    %45 = vector.shape_cast %44 : vector<1x128xf32> to vector<1x1x128xf32>
    %c0_25 = arith.constant 0 : index
    %c0_26 = arith.constant 0 : index
    %c0_27 = arith.constant 0 : index
    %46 = vector.load %arg7[%c0_25, %c0_26, %c0_27] : memref<1x1x128xf32, #tpu.memory_space<vmem>>, vector<1x1x128xf32>
    tpu.vector_store %arg7[%c0_25, %c0_26, %c0_27], %45 {strides = array<i32>} : memref<1x1x128xf32, #tpu.memory_space<vmem>>, vector<1x1x128xf32>,
    return
  }
  func.func @transform_0(%arg0: i32) -> (i32, i32, i32) {
    %c0_i32 = arith.constant 0 : i32
    %c0_i32_0 = arith.constant 0 : i32
    %c0_i32_1 = arith.constant 0 : i32
    return %arg0, %c0_i32, %c0_i32_0 : i32, i32, i32
  }
  func.func @transform_1(%arg0: i32) -> (i32, i32, i32) {
    %c0_i32 = arith.constant 0 : i32
    %c0_i32_0 = arith.constant 0 : i32
    %c0_i32_1 = arith.constant 0 : i32
    return %arg0, %c0_i32, %c0_i32_0 : i32, i32, i32
  }
  func.func @transform_2(%arg0: i32) -> (i32, i32, i32) {
    %c0_i32 = arith.constant 0 : i32
    %c0_i32_0 = arith.constant 0 : i32
    %c0_i32_1 = arith.constant 0 : i32
    %c0_i32_2 = arith.constant 0 : i32
    return %c0_i32, %c0_i32_0, %c0_i32_1 : i32, i32, i32
  }
  func.func @transform_3(%arg0: i32) -> (i32, i32, i32) {
    %c0_i32 = arith.constant 0 : i32
    %c0_i32_0 = arith.constant 0 : i32
    %c0_i32_1 = arith.constant 0 : i32
    %c0_i32_2 = arith.constant 0 : i32
    return %c0_i32, %c0_i32_0, %c0_i32_1 : i32, i32, i32
  }
  func.func @transform_4(%arg0: i32) -> (i32, i32, i32) {
    %c0_i32 = arith.constant 0 : i32
    %c0_i32_0 = arith.constant 0 : i32
    %c0_i32_1 = arith.constant 0 : i32
    %c0_i32_2 = arith.constant 0 : i32
    return %c0_i32, %c0_i32_0, %c0_i32_1 : i32, i32, i32
  }
  func.func @transform_5(%arg0: i32) -> (i32, i32, i32) {
    %c0_i32 = arith.constant 0 : i32
    %c0_i32_0 = arith.constant 0 : i32
    %c0_i32_1 = arith.constant 0 : i32
    return %arg0, %c0_i32, %c0_i32_0 : i32, i32, i32
  }
  func.func @transform_6(%arg0: i32) -> (i32, i32, i32) {
    %c0_i32 = arith.constant 0 : i32
    %c0_i32_0 = arith.constant 0 : i32
    %c0_i32_1 = arith.constant 0 : i32
    return %arg0, %c0_i32, %c0_i32_0 : i32, i32, i32
  }
}

</mosaic_0001>

<llo_original>
// kernel: context_attention_forward.1
$region0: #{context_attention_forward.1}
  #allocation0 [shape = 'u32[]', space=smem, size = 0x4, offset = 0x4, fixed_abs, tag = 'smem constant byte address 0x4 - core index']
  #allocation1 [shape = 'u32[72,128]{1,0:T(1,128)}', space=vmem, size = 0x9000, scoped, tag = 'internal scratch']
  %s0 = inlined_call_operand.vmem [shape: f32[2,8,128], index: 0, kind: input, shape index: {}]
  %s1 = inlined_call_operand.vmem [shape: f32[2,1,8], index: 1, kind: input, shape index: {}]
  %s2 = inlined_call_operand.vmem [shape: f32[1,128,128], index: 2, kind: input, shape index: {}]
  %s3 = inlined_call_operand.vmem [shape: f32[1,1,128], index: 3, kind: input, shape index: {}]
  %s4 = inlined_call_operand.vmem [shape: f32[1,1,128], index: 4, kind: input, shape index: {}]
  %s5 = inlined_call_operand.hbm [shape: f32[2,1,8], index: 5, kind: output, shape index: {0}]
  %s6 = inlined_call_operand.hbm [shape: f32[2,1,128], index: 6, kind: output, shape index: {1}]
  %7 = xla_tuple %s5, %s6
  %s8 = sld [smem:[#allocation0]]
  $region61: #{context_attention_forward.1} parent=0
    _
  %s10 = ssub.s32 1, %s8
  %s11 = scalar_select 0, %s10, %s8
  $region1: #{context_attention_forward.1} parent=0
    #allocation2 [shape = 'u8[1024]{0}', space=vmem, size = 0x400, scoped, tag = 'output window, operand 0']
    #allocation3 [shape = 's32[2]{0}', space=sflag, size = 0x8, scoped, tag = 'scoped memory for context_attention_forward.1']
    #allocation4 [shape = 'u8[1024]{0}', space=vmem, size = 0x400, scoped, tag = 'output window, operand 1']
    #allocation5 [shape = 's32[2]{0}', space=sflag, size = 0x8, scoped, tag = 'scoped memory for context_attention_forward.1']
    %12 = vsyncpa [#allocation3], 0
    %s13 = scalar_lea.sflag [#allocation3], 1
    %14 = vsyncpa %s13, 0
    %15 = vsyncpa [#allocation5], 0
    %s16 = scalar_lea.sflag [#allocation5], 1
    %17 = vsyncpa %s16, 0
    loop: start=0, step=1, limit=4
    $region2: #{context_attention_forward.1} parent=1 // loop_pre_header
      _
    $region3: #{context_attention_forward.1} parent=1 // loop_header
      %s19 = sphi 0, %s23
      %p20 = scmp.ge.s32.totalorder %s19, 4
      %s29 = sphi 0, %s31
      %s32 = sphi 0, %s29
      %s33 = sphi 0, %s32
      %s49 = sphi 0, %s33
      %s55 = sphi 0, %s57
      %s58 = sphi 0, %s55
      %s59 = sphi 0, %s58
      %s75 = sphi 0, %s59
      %s79 = sphi 0, %s79
      %s81 = sphi 0, %s79
      %s82 = sphi 0, %s81
      %s96 = sphi 0, %s82
      %s100 = sphi 0, %s100
      %s102 = sphi 0, %s100
      %s103 = sphi 0, %s102
      %s117 = sphi 0, %s103
      %s121 = sphi 0, %s121
      %s123 = sphi 0, %s121
      %s124 = sphi 0, %s123
      %s138 = sphi 0, %s124
      %s144 = sphi 0, %s146
      %s147 = sphi 0, %s144
      %s148 = sphi 0, %s147
      %s164 = sphi 0, %s148
      %s170 = sphi 0, %s172
      %s173 = sphi 0, %s170
      %s174 = sphi 0, %s173
      %s190 = sphi 0, %s174
    $region4: #{context_attention_forward.1} parent=1 // loop_header_branch
      %22 = sbr.rel (%p20) target = $region8
    $region5: #{context_attention_forward.1} parent=1 // loop_body
      %s24 = ssub.s32 %s19, 1
      %s25 = ssub.s32 %s19, 2
      %s26 = sadd.s32 %s19, 1
      %s27 = ssub.s32 %s19, %s26
      %p28 = scmp.eq.s32.totalorder %s27, 0
      %s30 = sadd.s32 %s29, 1
      %s31 = scalar_select %p28, %s29, %s30
      %p34 = pneg %p28
      %p35 = scmp.eq.s32.totalorder %s19, 1
      %p36 = por %p34, %p35
      %p37 = scmp.ne.s32.totalorder %s29, %s32
      %p38 = scmp.eq.s32.totalorder %s19, 0
      %p39 = por %p37, %p38
      %p40 = scmp.ne.s32.totalorder %s29, %s32
      %p41 = scmp.eq.s32.totalorder %s24, 1
      %p42 = por %p40, %p41
      %p43 = scmp.ne.s32.totalorder %s32, %s33
      %p44 = scmp.eq.s32.totalorder %s24, 0
      %p45 = por %p43, %p44
      %p46 = scmp.ne.s32.totalorder %s32, %s33
      %p47 = scmp.eq.s32.totalorder %s25, 1
      %p48 = por %p46, %p47
      %p50 = scmp.ne.s32.totalorder %s33, %s49
      %p51 = scmp.eq.s32.totalorder %s25, 0
      %p52 = por %p50, %p51
      %s53 = ssub.s32 %s19, %s26
      %p54 = scmp.eq.s32.totalorder %s53, 0
      %s56 = sadd.s32 %s55, 1
      %s57 = scalar_select %p54, %s55, %s56
      %p60 = pneg %p54
      %p61 = scmp.eq.s32.totalorder %s19, 1
      %p62 = por %p60, %p61
      %p63 = scmp.ne.s32.totalorder %s55, %s58
      %p64 = scmp.eq.s32.totalorder %s19, 0
      %p65 = por %p63, %p64
      %p66 = scmp.ne.s32.totalorder %s55, %s58
      %p67 = scmp.eq.s32.totalorder %s24, 1
      %p68 = por %p66, %p67
      %p69 = scmp.ne.s32.totalorder %s58, %s59
      %p70 = scmp.eq.s32.totalorder %s24, 0
      %p71 = por %p69, %p70
      %p72 = scmp.ne.s32.totalorder %s58, %s59
      %p73 = scmp.eq.s32.totalorder %s25, 1
      %p74 = por %p72, %p73
      %p76 = scmp.ne.s32.totalorder %s59, %s75
      %p77 = scmp.eq.s32.totalorder %s25, 0
      %p78 = por %p76, %p77
      %s80 = sadd.s32 %s79, 1
      %p83 = scmp.eq.s32.totalorder %s19, 1
      %p84 = scmp.ne.s32.totalorder %s79, %s81
      %p85 = scmp.eq.s32.totalorder %s19, 0
      %p86 = por %p84, %p85
      %p87 = scmp.ne.s32.totalorder %s79, %s81
      %p88 = scmp.eq.s32.totalorder %s24, 1
      %p89 = por %p87, %p88
      %p90 = scmp.ne.s32.totalorder %s81, %s82
      %p91 = scmp.eq.s32.totalorder %s24, 0
      %p92 = por %p90, %p91
      %p93 = scmp.ne.s32.totalorder %s81, %s82
      %p94 = scmp.eq.s32.totalorder %s25, 1
      %p95 = por %p93, %p94
      %p97 = scmp.ne.s32.totalorder %s82, %s96
      %p98 = scmp.eq.s32.totalorder %s25, 0
      %p99 = por %p97, %p98
      %s101 = sadd.s32 %s100, 1
      %p104 = scmp.eq.s32.totalorder %s19, 1
      %p105 = scmp.ne.s32.totalorder %s100, %s102
      %p106 = scmp.eq.s32.totalorder %s19, 0
      %p107 = por %p105, %p106
      %p108 = scmp.ne.s32.totalorder %s100, %s102
      %p109 = scmp.eq.s32.totalorder %s24, 1
      %p110 = por %p108, %p109
      %p111 = scmp.ne.s32.totalorder %s102, %s103
      %p112 = scmp.eq.s32.totalorder %s24, 0
      %p113 = por %p111, %p112
      %p114 = scmp.ne.s32.totalorder %s102, %s103
      %p115 = scmp.eq.s32.totalorder %s25, 1
      %p116 = por %p114, %p115
      %p118 = scmp.ne.s32.totalorder %s103, %s117
      %p119 = scmp.eq.s32.totalorder %s25, 0
      %p120 = por %p118, %p119
      %s122 = sadd.s32 %s121, 1
      %p125 = scmp.eq.s32.totalorder %s19, 1
      %p126 = scmp.ne.s32.totalorder %s121, %s123
      %p127 = scmp.eq.s32.totalorder %s19, 0
      %p128 = por %p126, %p127
      %p129 = scmp.ne.s32.totalorder %s121, %s123
      %p130 = scmp.eq.s32.totalorder %s24, 1
      %p131 = por %p129, %p130
      %p132 = scmp.ne.s32.totalorder %s123, %s124
      %p133 = scmp.eq.s32.totalorder %s24, 0
      %p134 = por %p132, %p133
      %p135 = scmp.ne.s32.totalorder %s123, %s124
      %p136 = scmp.eq.s32.totalorder %s25, 1
      %p137 = por %p135, %p136
      %p139 = scmp.ne.s32.totalorder %s124, %s138
      %p140 = scmp.eq.s32.totalorder %s25, 0
      %p141 = por %p139, %p140
      %s142 = ssub.s32 %s19, %s26
      %p143 = scmp.eq.s32.totalorder %s142, 0
      %s145 = sadd.s32 %s144, 1
      %s146 = scalar_select %p143, %s144, %s145
      %p149 = pneg %p143
      %p150 = scmp.eq.s32.totalorder %s19, 1
      %p151 = por %p149, %p150
      %p152 = scmp.ne.s32.totalorder %s144, %s147
      %p153 = scmp.eq.s32.totalorder %s19, 0
      %p154 = por %p152, %p153
      %p155 = scmp.ne.s32.totalorder %s144, %s147
      %p156 = scmp.eq.s32.totalorder %s24, 1
      %p157 = por %p155, %p156
      %p158 = scmp.ne.s32.totalorder %s147, %s148
      %p159 = scmp.eq.s32.totalorder %s24, 0
      %p160 = por %p158, %p159
      %p161 = scmp.ne.s32.totalorder %s147, %s148
      %p162 = scmp.eq.s32.totalorder %s25, 1
      %p163 = por %p161, %p162
      %p165 = scmp.ne.s32.totalorder %s148, %s164
      %p166 = scmp.eq.s32.totalorder %s25, 0
      %p167 = por %p165, %p166
      %s168 = ssub.s32 %s19, %s26
      %p169 = scmp.eq.s32.totalorder %s168, 0
      %s171 = sadd.s32 %s170, 1
      %s172 = scalar_select %p169, %s170, %s171
      %p175 = pneg %p169
      %p176 = scmp.eq.s32.totalorder %s19, 1
      %p177 = por %p175, %p176
      %p178 = scmp.ne.s32.totalorder %s170, %s173
      %p179 = scmp.eq.s32.totalorder %s19, 0
      %p180 = por %p178, %p179
      %p181 = scmp.ne.s32.totalorder %s170, %s173
      %p182 = scmp.eq.s32.totalorder %s24, 1
      %p183 = por %p181, %p182
      %p184 = scmp.ne.s32.totalorder %s173, %s174
      %p185 = scmp.eq.s32.totalorder %s24, 0
      %p186 = por %p184, %p185
      %p187 = scmp.ne.s32.totalorder %s173, %s174
      %p188 = scmp.eq.s32.totalorder %s25, 1
      %p189 = por %p187, %p188
      %p191 = scmp.ne.s32.totalorder %s174, %s190
      %p192 = scmp.eq.s32.totalorder %s25, 0
      %p193 = por %p191, %p192
      %p194 = scmp.le.s32.totalorder 1, %s19
      %p195 = scmp.lt.s32.totalorder %s19, 3
      %p196 = pnand %p194, %p195
      %p197 = pneg %p196
      // Predicated region
      $region9: #{context_attention_forward.1} parent=5 // pred_check
        _
      $region10: #{context_attention_forward.1} parent=5 // pred_check_branch
        %199 = sbr.rel (%p196) target = $region12
      $region11: #{context_attention_forward.1} parent=5 // pred_region
        %s200 = ssub.s32 %s19, 1
        // Predicated region
        $region13: #{context_attention_forward.1} parent=11 // pred_check
          %p201 = pneg %p92
        $region14: #{context_attention_forward.1} parent=11 // pred_check_branch
          %203 = sbr.rel (%p201) target = $region16
        $region15: #{context_attention_forward.1} parent=11 // pred_region
          _
        $region16: #{context_attention_forward.1} parent=11 // pred_fallthru
          _
        // Predicated region
        $region17: #{context_attention_forward.1} parent=11 // pred_check
          %p204 = pneg %p113
        $region18: #{context_attention_forward.1} parent=11 // pred_check_branch
          %206 = sbr.rel (%p204) target = $region20
        $region19: #{context_attention_forward.1} parent=11 // pred_region
          _
        $region20: #{context_attention_forward.1} parent=11 // pred_fallthru
          _
        // Predicated region
        $region21: #{context_attention_forward.1} parent=11 // pred_check
          %p207 = pneg %p134
        $region22: #{context_attention_forward.1} parent=11 // pred_check_branch
          %209 = sbr.rel (%p207) target = $region24
        $region23: #{context_attention_forward.1} parent=11 // pred_region
          _
        $region24: #{context_attention_forward.1} parent=11 // pred_fallthru
          _
      $region12: #{context_attention_forward.1} parent=5 // pred_fallthru
        _
      %p210 = scmp.lt.s32.totalorder %s19, 2
      // Predicated region
      $region25: #{context_attention_forward.1} parent=5 // pred_check
        %p211 = pneg %p210
      $region26: #{context_attention_forward.1} parent=5 // pred_check_branch
        %213 = sbr.rel (%p211) target = $region28
      $region27: #{context_attention_forward.1} parent=5 // pred_region
        // Predicated region
        $region29: #{context_attention_forward.1} parent=27 // pred_check
          %p214 = pneg %p39
        $region30: #{context_attention_forward.1} parent=27 // pred_check_branch
          %216 = sbr.rel (%p214) target = $region32
        $region31: #{context_attention_forward.1} parent=27 // pred_region
          %p217 = scmp.lt.s32.totalorder %s19, 1
          %s218 = scalar_select %p217, %s19, 1
          %s219 = smul.addr %s218, 8
          %s220 = scalar_lea.vmem %s0, %s219
        $region32: #{context_attention_forward.1} parent=27 // pred_fallthru
          _
        // Predicated region
        $region33: #{context_attention_forward.1} parent=27 // pred_check
          %p221 = pneg %p65
        $region34: #{context_attention_forward.1} parent=27 // pred_check_branch
          %223 = sbr.rel (%p221) target = $region36
        $region35: #{context_attention_forward.1} parent=27 // pred_region
          %p224 = scmp.lt.s32.totalorder %s19, 1
          %s225 = scalar_select %p224, %s19, 1
          %s226 = scalar_lea.vmem %s1, %s225
        $region36: #{context_attention_forward.1} parent=27 // pred_fallthru
          _
      $region28: #{context_attention_forward.1} parent=5 // pred_fallthru
        _
      %p227 = scmp.le.s32.totalorder 1, %s19
      %p228 = scmp.lt.s32.totalorder %s19, 3
      %p229 = pnand %p227, %p228
      %p230 = pneg %p229
      // Predicated region
      $region37: #{context_attention_forward.1} parent=5 // pred_check
        _
      $region38: #{context_attention_forward.1} parent=5 // pred_check_branch
        %232 = sbr.rel (%p229) target = $region40
      $region39: #{context_attention_forward.1} parent=5 // pred_region
        %s233 = ssub.s32 %s19, 1
        %p234 = scmp.lt.s32.totalorder %s24, 1
        %s235 = scalar_select %p234, %s24, 1
        %s236 = smul.addr %s235, 8
        %s237 = scalar_lea.vmem %s0, %s236
        %p238 = pneg %p45
        %p239 = pneg %p42
        %p240 = scmp.lt.s32.totalorder %s24, 1
        %s241 = scalar_select %p240, %s24, 1
        %s242 = scalar_lea.vmem %s1, %s241
        %p243 = pneg %p71
        %p244 = pneg %p68
        %p245 = pneg %p92
        %p246 = pneg %p89
        %p247 = pneg %p113
        %p248 = pneg %p110
        %p249 = pneg %p134
        %p250 = pneg %p131
        %p251 = pneg %p160
        %p252 = pneg %p157
        %s253 = sand.u32 %s147, 1
        %s254 = scalar_lea.sflag [#allocation3], %s253
        %s255 = sand.u32 %s147, 1
        %s256 = scalar_lea.vmem [#allocation2], %s255
        %p257 = pneg %p186
        %p258 = pneg %p183
        %s259 = sand.u32 %s173, 1
        %s260 = scalar_lea.sflag [#allocation5], %s259
        %s261 = sand.u32 %s173, 1
        %s262 = scalar_lea.vmem [#allocation4], %s261
        %p263 = scmp.lt.s32.totalorder %s24, 1
        %s264 = scalar_select %p263, %s24, 1
        %s265 = smul.addr %s264, 8
        %s266 = scalar_lea.vmem %s0, %s265
        %p267 = scmp.lt.s32.totalorder %s24, 1
        %s268 = scalar_select %p267, %s24, 1
        %s269 = scalar_lea.vmem %s1, %s268
        %v270 = vld [vmem:[%s266] sm:$0xff]
        %v271 = vld [vmem:[%s2] sm:$0xff]
        %v272 = vld [vmem:[%s2 + $0x8] sm:$0xff]
        %v273 = vld [vmem:[%s2 + $0x10] sm:$0xff]
        %v274 = vld [vmem:[%s2 + $0x18] sm:$0xff]
        %v275 = vld [vmem:[%s2 + $0x20] sm:$0xff]
        %v276 = vld [vmem:[%s2 + $0x28] sm:$0xff]
        %v277 = vld [vmem:[%s2 + $0x30] sm:$0xff]
        %v278 = vld [vmem:[%s2 + $0x38] sm:$0xff]
        %v279 = vld [vmem:[%s2 + $0x40] sm:$0xff]
        %v280 = vld [vmem:[%s2 + $0x48] sm:$0xff]
        %v281 = vld [vmem:[%s2 + $0x50] sm:$0xff]
        %v282 = vld [vmem:[%s2 + $0x58] sm:$0xff]
        %v283 = vld [vmem:[%s2 + $0x60] sm:$0xff]
        %v284 = vld [vmem:[%s2 + $0x68] sm:$0xff]
        %v285 = vld [vmem:[%s2 + $0x70] sm:$0xff]
        %v286 = vld [vmem:[%s2 + $0x78] sm:$0xff]
        %v287 = vld [vmem:[%s3] sm:$0x1]
        %v289 = vperm.slane %v287, 0
        %291 = vmatpush.msra.mxu0 %v286
        %292 = vmatpush.msra.mxu0 %v285
        %293 = vmatpush.msra.mxu0 %v284
        %294 = vmatpush.msra.mxu0 %v283
        %295 = vmatpush.msra.mxu0 %v282
        %296 = vmatpush.msra.mxu0 %v281
        %297 = vmatpush.msra.mxu0 %v280
        %298 = vmatpush.msra.mxu0 %v279
        %299 = vmatpush.msra.mxu0 %v278
        %300 = vmatpush.msra.mxu0 %v277
        %301 = vmatpush.msra.mxu0 %v276
        %302 = vmatpush.msra.mxu0 %v275
        %303 = vmatpush.msra.mxu0 %v274
        %304 = vmatpush.msra.mxu0 %v273
        %305 = vmatpush.msra.mxu0 %v272
        %306 = vmatpush.msra.mxu0 %v271
        %307 = vmatmul.f32.gmra.mxu0 %v270
        %v308 = vpop.f32.mrf.mxu0
        %v309 = vadd.f32 %v289, %v308
        %310 = vdwg.mxu0
        %v311 = vtanh.pop %v309
        %v312 = vld [vmem:[%s4] sm:$0x1]
        %v314 = vperm.slane %v312, 0
        %v316 = vmul.f32 %v311, %v314
        %317 = vadd.xlane.f32.xlu0 %v316
        %v318 = vpop.xlane.xlu0 %317
        %v319 = vadd.f32 %v318, 0.0
        %320 = vxpose.xlu0.b32.start [1/16] %v319, 128
        %321 = vxpose.xlu0.b32.cont [2/16] 0.0, 128
        %322 = vxpose.xlu0.b32.cont [3/16] 0.0, 128
        %323 = vxpose.xlu0.b32.cont [4/16] 0.0, 128
        %324 = vxpose.xlu0.b32.cont [5/16] 0.0, 128
        %325 = vxpose.xlu0.b32.cont [6/16] 0.0, 128
        %326 = vxpose.xlu0.b32.cont [7/16] 0.0, 128
        %327 = vxpose.xlu0.b32.cont [8/16] 0.0, 128
        %328 = vxpose.xlu0.b32.cont [9/16] 0.0, 128
        %329 = vxpose.xlu0.b32.cont [10/16] 0.0, 128
        %330 = vxpose.xlu0.b32.cont [11/16] 0.0, 128
        %331 = vxpose.xlu0.b32.cont [12/16] 0.0, 128
        %332 = vxpose.xlu0.b32.cont [13/16] 0.0, 128
        %333 = vxpose.xlu0.b32.cont [14/16] 0.0, 128
        %334 = vxpose.xlu0.b32.cont [15/16] 0.0, 128
        %335 = vxpose.xlu0.b32.end [16/16] 0.0, 128
        %v336 = vpop.trf.xlu0
        %v337 = vpop.trf.xlu0
        %v338 = vpop.trf.xlu0
        %v339 = vpop.trf.xlu0
        %v340 = vpop.trf.xlu0
        %v341 = vpop.trf.xlu0
        %v342 = vpop.trf.xlu0
        %v343 = vpop.trf.xlu0
        %v344 = vpop.trf.xlu0
        %v345 = vpop.trf.xlu0
        %v346 = vpop.trf.xlu0
        %v347 = vpop.trf.xlu0
        %v348 = vpop.trf.xlu0
        %v349 = vpop.trf.xlu0
        %v350 = vpop.trf.xlu0
        %v351 = vpop.trf.xlu0
        %v352 = vld [vmem:[%s269] sm:$0x1]
        %vm353 = vcmp.eq.f32.partialorder %v352, 0.0
        %v354 = vsel %vm353, -100.0, %v336
        %vm355 = vcmask 57344
        %v356 = vsel %vm355, %v354, -inf
        %357 = vmax.xlane.f32.xlu0 %v356
        %v358 = vpop.xlane.xlu0 %357
        %v359 = vsub.f32 %v354, %v358
        %v360 = vmul.f32 %v359, 1.442695
        %v361 = vpow.pop %v360
        %v362 = vsel %vm355, %v361, 0.0
        %363 = vadd.xlane.f32.xlu0 %v362
        %v364 = vpop.xlane.xlu0 %363
        %v365 = vrcp.pop %v364
        %v366 = vmul.f32 %v364, %v365
        %v367 = vsub.f32 1.0, %v366
        %v368 = vmul.f32 %v365, %v367
        %v369 = vadd.f32 %v365, %v368
        %vm370 = vweird.f32 %v364
        %vm371 = vweird.f32 %v365
        %vm372 = vmor %vm370, %vm371
        %v373 = vsel %vm372, %v365, %v369
        %v374 = vand.u32 2147483647, %v364
        %vm375 = vcmp.eq.f32.partialorder %v374, 8.507059e+37
        %v376 = vand.u32 %v364, 2147483648
        %v377 = vor.u32 1.1754944e-38, %v376
        %v378 = vsel %vm375, %v377, %v373
        %v379 = vmul.f32 1.0, %v378
        %v380 = vmul.f32 %v361, %v379
        %381 = vst.msk [vmem:[%s256] sm:$0x1] %vm355, %v380
        %382 = vxpose.xlu0.b32.start [1/16] %v380, 128
        %383 = vxpose.xlu0.b32.cont [2/16] 0.0, 128
        %384 = vxpose.xlu0.b32.cont [3/16] 0.0, 128
        %385 = vxpose.xlu0.b32.cont [4/16] 0.0, 128
        %386 = vxpose.xlu0.b32.cont [5/16] 0.0, 128
        %387 = vxpose.xlu0.b32.cont [6/16] 0.0, 128
        %388 = vxpose.xlu0.b32.cont [7/16] 0.0, 128
        %389 = vxpose.xlu0.b32.cont [8/16] 0.0, 128
        %390 = vxpose.xlu0.b32.cont [9/16] 0.0, 128
        %391 = vxpose.xlu0.b32.cont [10/16] 0.0, 128
        %392 = vxpose.xlu0.b32.cont [11/16] 0.0, 128
        %393 = vxpose.xlu0.b32.cont [12/16] 0.0, 128
        %394 = vxpose.xlu0.b32.cont [13/16] 0.0, 128
        %395 = vxpose.xlu0.b32.cont [14/16] 0.0, 128
        %396 = vxpose.xlu0.b32.cont [15/16] 0.0, 128
        %397 = vxpose.xlu0.b32.end [16/16] 0.0, 128
        %v398 = vpop.trf.xlu0
        %v399 = vpop.trf.xlu0
        %v400 = vpop.trf.xlu0
        %v401 = vpop.trf.xlu0
        %v402 = vpop.trf.xlu0
        %v403 = vpop.trf.xlu0
        %v404 = vpop.trf.xlu0
        %v405 = vpop.trf.xlu0
        %v406 = vpop.trf.xlu0
        %v407 = vpop.trf.xlu0
        %v408 = vpop.trf.xlu0
        %v409 = vpop.trf.xlu0
        %v410 = vpop.trf.xlu0
        %v411 = vpop.trf.xlu0
        %v412 = vpop.trf.xlu0
        %v413 = vpop.trf.xlu0
        %v414 = vld [vmem:[%s266] sm:$0xff]
        %416 = vset.pattern.permute.xlu0 0
        %417 = vperm.xlu0 %416, %v398
        %v418 = vpop.permute.xlu0 %417
        %v420 = vmul.f32 %v418, %v414
        %v421 = vrot.slane %v420, 4
        %v422 = vadd.f32 %v420, %v421
        %v423 = vrot.slane %v422, 2
        %v424 = vadd.f32 %v422, %v423
        %v425 = vrot.slane %v424, 1
        %v426 = vadd.f32 %v424, %v425
        %427 = vst [vmem:[%s262] sm:$0x1] %v426
        %s428 = sand.u32 %s147, 1
        %s429 = scalar_lea.sflag [#allocation3], %s428
        %s430 = sand.u32 %s147, 1
        %s431 = scalar_lea.vmem [#allocation2], %s430
        %s432 = sand.u32 %s173, 1
        %s433 = scalar_lea.sflag [#allocation5], %s432
        %s434 = sand.u32 %s173, 1
        %s435 = scalar_lea.vmem [#allocation4], %s434
        // Predicated region
        $region41: #{context_attention_forward.1} parent=39 // pred_check
          %p436 = pneg %p157
        $region42: #{context_attention_forward.1} parent=39 // pred_check_branch
          %438 = sbr.rel (%p436) target = $region44
        $region43: #{context_attention_forward.1} parent=39 // pred_region
          %440 = vsyncadd %s429, 0
          %s441 = scalar_lea.hbm %s5, %s24
          %s443 = sshll.u32 %s431, 4
          %s444 = int_to_ptr.vmem [resolvable:$true] %s443
          %s445 = sshll.u32 %s441, 4
          %s446 = int_to_ptr.hbm [resolvable:$true] %s445
          %448 = dma.vmem_to_hbm [thread:$0]  %s444, 16, %s446, %s429
        $region44: #{context_attention_forward.1} parent=39 // pred_fallthru
          _
        // Predicated region
        $region45: #{context_attention_forward.1} parent=39 // pred_check
          %p449 = pneg %p183
        $region46: #{context_attention_forward.1} parent=39 // pred_check_branch
          %451 = sbr.rel (%p449) target = $region48
        $region47: #{context_attention_forward.1} parent=39 // pred_region
          %453 = vsyncadd %s433, 0
          %s454 = scalar_lea.hbm %s6, %s24
          %s456 = sshll.u32 %s435, 4
          %s457 = int_to_ptr.vmem [resolvable:$true] %s456
          %s458 = sshll.u32 %s454, 4
          %s459 = int_to_ptr.hbm [resolvable:$true] %s458
          %461 = dma.vmem_to_hbm [thread:$0]  %s457, 16, %s459, %s433
        $region48: #{context_attention_forward.1} parent=39 // pred_fallthru
          _
      $region40: #{context_attention_forward.1} parent=5 // pred_fallthru
        _
      %p462 = scmp.le.s32.totalorder 2, %s19
      // Predicated region
      $region49: #{context_attention_forward.1} parent=5 // pred_check
        %p463 = pneg %p462
      $region50: #{context_attention_forward.1} parent=5 // pred_check_branch
        %465 = sbr.rel (%p463) target = $region52
      $region51: #{context_attention_forward.1} parent=5 // pred_region
        %s466 = ssub.s32 %s19, 2
        // Predicated region
        $region53: #{context_attention_forward.1} parent=51 // pred_check
          %p467 = pneg %p163
        $region54: #{context_attention_forward.1} parent=51 // pred_check_branch
          %469 = sbr.rel (%p467) target = $region56
        $region55: #{context_attention_forward.1} parent=51 // pred_region
          %s470 = sand.u32 %s148, 1
          %s471 = scalar_lea.sflag [#allocation3], %s470
          %s472 = sand.u32 %s148, 1
          %s473 = scalar_lea.vmem [#allocation2], %s472
          %475 = dma.done %s471, 16
        $region56: #{context_attention_forward.1} parent=51 // pred_fallthru
          _
        // Predicated region
        $region57: #{context_attention_forward.1} parent=51 // pred_check
          %p476 = pneg %p189
        $region58: #{context_attention_forward.1} parent=51 // pred_check_branch
          %478 = sbr.rel (%p476) target = $region60
        $region59: #{context_attention_forward.1} parent=51 // pred_region
          %s479 = sand.u32 %s174, 1
          %s480 = scalar_lea.sflag [#allocation5], %s479
          %s481 = sand.u32 %s174, 1
          %s482 = scalar_lea.vmem [#allocation4], %s481
          %484 = dma.done %s480, 16
        $region60: #{context_attention_forward.1} parent=51 // pred_fallthru
          _
      $region52: #{context_attention_forward.1} parent=5 // pred_fallthru
        _
    $region6: #{context_attention_forward.1} parent=1 // loop_footer
      %s23 = sadd.s32 1, %s19
    $region7: #{context_attention_forward.1} parent=1 // loop_footer_branch
      %18 = sbr.rel target = $region3
    $region8: #{context_attention_forward.1} parent=1 // loop_exit
      _
    %485 = vsyncpa [#allocation3], 1
    %s486 = scalar_lea.sflag [#allocation3], 1
    %487 = vsyncpa %s486, 1
    %488 = vsyncpa [#allocation5], 1
    %s489 = scalar_lea.sflag [#allocation5], 1
    %490 = vsyncpa %s489, 1

</llo_original>
